<compile_context>
chip_gen: v7x
topology: tpu7x:2x2x1
jax: 0.10.0
libtpu: 0.0.40
codegen_flags: <defaults>
</compile_context>

<pallas_src>
import jax
import jax.numpy as jnp
from jax import lax
from jax.experimental import pallas as pl
from jax.experimental.pallas import tpu as pltpu


def _ff_kernel(x_ref, wa_ref, ba_ref, wg_ref, bg_ref, w2_ref, b2_ref,
               o_ref, acc_ref):
    h = pl.program_id(1)

    x = x_ref[...]

    # Value and gate projections on the MXU (operands stay in input dtype,
    # f32 accumulation via preferred_element_type).
    a = jnp.dot(x, wa_ref[...], preferred_element_type=jnp.float32)
    a = a + ba_ref[...].astype(jnp.float32)
    g = jnp.dot(x, wg_ref[...], preferred_element_type=jnp.float32)
    g = g + bg_ref[...].astype(jnp.float32)

    # Exact (erf) GELU epilogue in f32 — matches torch.nn.functional.gelu
    # default; erf lowers to the EUP so it stays off the VALU slots.
    inv_sqrt2 = jnp.float32(0.7071067811865475)
    y = a * (0.5 * g * (1.0 + lax.erf(g * inv_sqrt2)))

    # Partial contribution of this hidden tile to the output projection.
    partial = jnp.dot(y.astype(w2_ref.dtype), w2_ref[...],
                      preferred_element_type=jnp.float32)

    @pl.when(h == 0)
    def _():
        acc_ref[...] = jnp.broadcast_to(
            b2_ref[...].astype(jnp.float32), acc_ref.shape)

    acc_ref[...] += partial

    @pl.when(h == pl.num_programs(1) - 1)
    def _():
        o_ref[...] = acc_ref[...].astype(o_ref.dtype)


def _pick_hidden_tile(dim, hidden, w_itemsize, budget_bytes=24 << 20):
    """Largest 128-aligned divisor of `hidden` whose resident weight slab
    (wa + wg + w2 columns/rows) fits the budget; fall back to full hidden."""
    per_unit = 3 * dim * w_itemsize  # one hidden column of wa+wg + one row of w2
    if hidden * per_unit <= budget_bytes or hidden % 128 != 0:
        return hidden
    max_th = max(128, (budget_bytes // per_unit) // 128 * 128)
    for cand in range(min(hidden, max_th), 127, -128):
        if hidden % cand == 0:
            return cand
    return hidden


def feedforward_pallas(x, w1, b1, w2, b2, *, tm=None, th=None):
    """x: (B, S, dim). w1: (dim, 2*hidden), b1: (2*hidden,),
    w2: (hidden, dim), b2: (dim,). Returns (B, S, dim)."""
    B, S, dim = x.shape
    M = B * S
    x2d = x.reshape(M, dim)

    two_h = w1.shape[1]
    hidden = two_h // 2

    # Pre-split W1 / b1 into value ("a") and gate ("g") halves at the wrapper
    # (layout plumbing only) so no (TM, 2H) intermediate exists in-kernel.
    wa = w1[:, :hidden]
    wg = w1[:, hidden:]
    ba = b1[:hidden].reshape(1, hidden).astype(jnp.float32)
    bg = b1[hidden:].reshape(1, hidden).astype(jnp.float32)
    b2r = b2.reshape(1, dim).astype(jnp.float32)

    x_itemsize = jnp.dtype(x.dtype).itemsize
    w_itemsize = jnp.dtype(w1.dtype).itemsize

    # Token tile: ~512 rows for f32, ~1024 for bf16 (MXU/HBM-roofline friendly).
    if tm is None:
        tm = 1024 if x.dtype == jnp.bfloat16 else 512
    tm = min(tm, M)

    # Hidden tile: keep resident weights bounded (v7x has only 64 MiB VMEM).
    if th is None:
        th = _pick_hidden_tile(dim, hidden, w_itemsize)

    grid_m = pl.cdiv(M, tm)
    grid_h = pl.cdiv(hidden, th)

    # VMEM budget: double-buffered weight/bias/activation tiles + f32 epilogue
    # intermediates + accumulator scratch, with ~25% headroom (capped at 64 MiB
    # so the request is valid on every generation).
    weight_tile = 2 * (3 * dim * th) * w_itemsize
    bias_tile = 2 * (2 * th + dim) * 4
    act_tiles = 2 * 2 * tm * dim * x_itemsize
    f32_interm = tm * (3 * th + 2 * dim) * 4
    needed = weight_tile + bias_tile + act_tiles + f32_interm
    vmem_limit = int(min(64 << 20, max(needed * 5 // 4, 16 << 20)))

    cost = pl.CostEstimate(
        flops=2 * M * dim * two_h + 2 * M * hidden * dim,
        transcendentals=M * hidden,
        bytes_accessed=(x2d.size * x_itemsize
                        + (w1.size + w2.size) * w_itemsize
                        + (b1.size + b2.size) * 4
                        + M * dim * x_itemsize),
    )

    out2d = pl.pallas_call(
        _ff_kernel,
        out_shape=jax.ShapeDtypeStruct((M, dim), x.dtype),
        grid_spec=pltpu.PrefetchScalarGridSpec(
            num_scalar_prefetch=0,
            grid=(grid_m, grid_h),
            in_specs=[
                pl.BlockSpec((tm, dim), lambda i, h: (i, 0)),     # x tile
                pl.BlockSpec((dim, th), lambda i, h: (0, h)),     # W1 value half
                pl.BlockSpec((1, th), lambda i, h: (0, h)),       # b1 value half
                pl.BlockSpec((dim, th), lambda i, h: (0, h)),     # W1 gate half
                pl.BlockSpec((1, th), lambda i, h: (0, h)),       # b1 gate half
                pl.BlockSpec((th, dim), lambda i, h: (h, 0)),     # W2 tile
                pl.BlockSpec((1, dim), lambda i, h: (0, 0)),      # b2
            ],
            out_specs=pl.BlockSpec((tm, dim), lambda i, h: (i, 0)),
            scratch_shapes=[pltpu.VMEM((tm, dim), jnp.float32)],
        ),
        compiler_params=pltpu.CompilerParams(
            dimension_semantics=("parallel", "arbitrary"),
            vmem_limit_bytes=vmem_limit,
        ),
        cost_estimate=cost,
    )(x2d, wa, ba, wg, bg, w2, b2r)

    return out2d.reshape(B, S, dim)


def feedforward_ref(x, w1, b1, w2, b2):
    """Pure-JAX reference (mirrors the PyTorch module)."""
    h = jnp.einsum("bsd,dk->bsk", x, w1) + b1
    hidden = h.shape[-1] // 2
    a, g = h[..., :hidden], h[..., hidden:]
    y = a * (0.5 * g * (1.0 + lax.erf(g / jnp.sqrt(2.0))))
    return jnp.einsum("bsh,hd->bsd", y, w2) + b2


def init_params(key, dim, mult):
    """Deterministic init mimicking nn.Linear (uniform +-1/sqrt(fan_in))."""
    hidden = dim * mult
    k1, k2, k3, k4 = jax.random.split(key, 4)
    bound1 = 1.0 / jnp.sqrt(dim)
    bound2 = 1.0 / jnp.sqrt(hidden)
    w1 = jax.random.uniform(k1, (dim, 2 * hidden), jnp.float32, -bound1, bound1)
    b1 = jax.random.uniform(k2, (2 * hidden,), jnp.float32, -bound1, bound1)
    w2 = jax.random.uniform(k3, (hidden, dim), jnp.float32, -bound2, bound2)
    b2 = jax.random.uniform(k4, (dim,), jnp.float32, -bound2, bound2)
    return w1, b1, w2, b2


if __name__ == "__main__":
    B, S, dim, mult = 2, 8, 32, 4

    key = jax.random.PRNGKey(0)
    kx, kp = jax.random.split(key)
    x = jax.random.normal(kx, (B, S, dim), jnp.float32)
    w1, b1, w2, b2 = init_params(kp, dim, mult)

    out = feedforward_pallas(x, w1, b1, w2, b2)
    out = jax.block_until_ready(out)

    ref = feedforward_ref(x, w1, b1, w2, b2)
    assert out.shape == (B, S, dim)
    assert jnp.allclose(out, ref, atol=1e-4, rtol=1e-4), (
        float(jnp.max(jnp.abs(out - ref))))

    print("KERNEL_OK")
</pallas_src>

<mosaic_0001>
module attributes {stable_mosaic.version = 11 : i64} {
  func.func @_ff_kernel(%arg0: i32, %arg1: i32, %arg2: memref<16x32xf32, #tpu.memory_space<vmem>>, %arg3: memref<32x128xf32, #tpu.memory_space<vmem>>, %arg4: memref<1x128xf32, #tpu.memory_space<vmem>>, %arg5: memref<32x128xf32, #tpu.memory_space<vmem>>, %arg6: memref<1x128xf32, #tpu.memory_space<vmem>>, %arg7: memref<128x32xf32, #tpu.memory_space<vmem>>, %arg8: memref<1x32xf32, #tpu.memory_space<vmem>>, %arg9: memref<16x32xf32, #tpu.memory_space<vmem>>, %arg10: memref<16x32xf32, #tpu.memory_space<vmem>>) attributes {dimension_semantics = [#tpu.dimension_semantics<parallel>, #tpu.dimension_semantics<arbitrary>], iteration_bounds = array<i64: 1, 1>, scalar_prefetch = 0 : i64, scratch_operands = 1 : i64, tpu.core_type = #tpu.core_type<tc>, window_params = [{transform_indices = @transform_0, window_bounds = array<i64: 16, 32>}, {transform_indices = @transform_1, window_bounds = array<i64: 32, 128>}, {transform_indices = @transform_2, window_bounds = array<i64: 1, 128>}, {transform_indices = @transform_3, window_bounds = array<i64: 32, 128>}, {transform_indices = @transform_4, window_bounds = array<i64: 1, 128>}, {transform_indices = @transform_5, window_bounds = array<i64: 128, 32>}, {pipeline_mode = #tpu.pipeline_mode<synchronous>, transform_indices = @transform_6, window_bounds = array<i64: 1, 32>}, {transform_indices = @transform_7, window_bounds = array<i64: 16, 32>}]} {
    %c0 = arith.constant 0 : index
    %c0_0 = arith.constant 0 : index
    %0 = vector.load %arg2[%c0, %c0_0] : memref<16x32xf32, #tpu.memory_space<vmem>>, vector<16x32xf32>
    %c0_1 = arith.constant 0 : index
    %c0_2 = arith.constant 0 : index
    %1 = vector.load %arg3[%c0_1, %c0_2] : memref<32x128xf32, #tpu.memory_space<vmem>>, vector<32x128xf32>
    %cst = arith.constant dense<0.000000e+00> : vector<16x128xf32>
    %2 = tpu.matmul %0, %1, %cst {dimension_numbers = #tpu.dot_dimension_numbers<[1], [0], [0], [1], [0, 0, 1, 1], [], []>} : vector<16x32xf32>, vector<32x128xf32>, vector<16x128xf32> -> vector<16x128xf32>
    %c0_3 = arith.constant 0 : index
    %c0_4 = arith.constant 0 : index
    %3 = vector.load %arg4[%c0_3, %c0_4] : memref<1x128xf32, #tpu.memory_space<vmem>>, vector<1x128xf32>
    %4 = vector.broadcast %3 : vector<1x128xf32> to vector<16x128xf32>
    %5 = arith.addf %2, %4 : vector<16x128xf32>
    %c0_5 = arith.constant 0 : index
    %c0_6 = arith.constant 0 : index
    %6 = vector.load %arg5[%c0_5, %c0_6] : memref<32x128xf32, #tpu.memory_space<vmem>>, vector<32x128xf32>
    %cst_7 = arith.constant dense<0.000000e+00> : vector<16x128xf32>
    %7 = tpu.matmul %0, %6, %cst_7 {dimension_numbers = #tpu.dot_dimension_numbers<[1], [0], [0], [1], [0, 0, 1, 1], [], []>} : vector<16x32xf32>, vector<32x128xf32>, vector<16x128xf32> -> vector<16x128xf32>
    %c0_8 = arith.constant 0 : index
    %c0_9 = arith.constant 0 : index
    %8 = vector.load %arg6[%c0_8, %c0_9] : memref<1x128xf32, #tpu.memory_space<vmem>>, vector<1x128xf32>
    %9 = vector.broadcast %8 : vector<1x128xf32> to vector<16x128xf32>
    %10 = arith.addf %7, %9 : vector<16x128xf32>
    %cst_10 = arith.constant 5.000000e-01 : f32
    %11 = vector.broadcast %cst_10 : f32 to vector<16x128xf32>
    %12 = arith.mulf %11, %10 : vector<16x128xf32>
    %cst_11 = arith.constant 0.707106769 : f32
    %13 = vector.broadcast %cst_11 : f32 to vector<16x128xf32>
    %14 = arith.mulf %10, %13 : vector<16x128xf32>
    %15 = math.erf %14 : vector<16x128xf32>
    %cst_12 = arith.constant 1.000000e+00 : f32
    %16 = vector.broadcast %cst_12 : f32 to vector<16x128xf32>
    %17 = arith.addf %16, %15 : vector<16x128xf32>
    %18 = arith.mulf %12, %17 : vector<16x128xf32>
    %19 = arith.mulf %5, %18 : vector<16x128xf32>
    %c0_13 = arith.constant 0 : index
    %c0_14 = arith.constant 0 : index
    %20 = vector.load %arg7[%c0_13, %c0_14] : memref<128x32xf32, #tpu.memory_space<vmem>>, vector<128x32xf32>
    %cst_15 = arith.constant dense<0.000000e+00> : vector<16x32xf32>
    %21 = tpu.matmul %19, %20, %cst_15 {dimension_numbers = #tpu.dot_dimension_numbers<[1], [0], [0], [1], [0, 0, 1, 1], [], []>} : vector<16x128xf32>, vector<128x32xf32>, vector<16x32xf32> -> vector<16x32xf32>
    %c0_i32 = arith.constant 0 : i32
    %22 = arith.cmpi eq, %arg1, %c0_i32 : i32
    %23 = arith.extui %22 : i1 to i32
    %c0_i32_16 = arith.constant 0 : i32
    %24 = arith.cmpi ne, %23, %c0_i32_16 : i32
    scf.if %24 {
      %c0_23 = arith.constant 0 : index
      %c0_24 = arith.constant 0 : index
      %31 = vector.load %arg8[%c0_23, %c0_24] : memref<1x32xf32, #tpu.memory_space<vmem>>, vector<1x32xf32>
      %32 = vector.shape_cast %31 : vector<1x32xf32> to vector<1x32xf32>
      %33 = vector.broadcast %32 : vector<1x32xf32> to vector<16x32xf32>
      %c0_25 = arith.constant 0 : index
      %c0_26 = arith.constant 0 : index
      %34 = vector.load %arg10[%c0_25, %c0_26] : memref<16x32xf32, #tpu.memory_space<vmem>>, vector<16x32xf32>
      tpu.vector_store %arg10[%c0_25, %c0_26], %33 {strides = array<i32>} : memref<16x32xf32, #tpu.memory_space<vmem>>, vector<16x32xf32>,
    } else {
    }
    %c0_17 = arith.constant 0 : index
    %c0_18 = arith.constant 0 : index
    %25 = vector.load %arg10[%c0_17, %c0_18] : memref<16x32xf32, #tpu.memory_space<vmem>>, vector<16x32xf32>
    %26 = arith.addf %25, %21 : vector<16x32xf32>
    %c0_19 = arith.constant 0 : index
    %c0_20 = arith.constant 0 : index
    %27 = vector.load %arg10[%c0_19, %c0_20] : memref<16x32xf32, #tpu.memory_space<vmem>>, vector<16x32xf32>
    tpu.vector_store %arg10[%c0_19, %c0_20], %26 {strides = array<i32>} : memref<16x32xf32, #tpu.memory_space<vmem>>, vector<16x32xf32>,
    %c0_i32_21 = arith.constant 0 : i32
    %28 = arith.cmpi eq, %arg1, %c0_i32_21 : i32
    %29 = arith.extui %28 : i1 to i32
    %c0_i32_22 = arith.constant 0 : i32
    %30 = arith.cmpi ne, %29, %c0_i32_22 : i32
    scf.if %30 {
      %c0_23 = arith.constant 0 : index
      %c0_24 = arith.constant 0 : index
      %31 = vector.load %arg10[%c0_23, %c0_24] : memref<16x32xf32, #tpu.memory_space<vmem>>, vector<16x32xf32>
      %c0_25 = arith.constant 0 : index
      %c0_26 = arith.constant 0 : index
      %32 = vector.load %arg9[%c0_25, %c0_26] : memref<16x32xf32, #tpu.memory_space<vmem>>, vector<16x32xf32>
      tpu.vector_store %arg9[%c0_25, %c0_26], %31 {strides = array<i32>} : memref<16x32xf32, #tpu.memory_space<vmem>>, vector<16x32xf32>,
    } else {
    }
    return
  }
  func.func @transform_0(%arg0: i32, %arg1: i32) -> (i32, i32) {
    %c0_i32 = arith.constant 0 : i32
    %c0_i32_0 = arith.constant 0 : i32
    return %arg0, %c0_i32 : i32, i32
  }
  func.func @transform_1(%arg0: i32, %arg1: i32) -> (i32, i32) {
    %c0_i32 = arith.constant 0 : i32
    %c0_i32_0 = arith.constant 0 : i32
    return %c0_i32, %arg1 : i32, i32
  }
  func.func @transform_2(%arg0: i32, %arg1: i32) -> (i32, i32) {
    %c0_i32 = arith.constant 0 : i32
    %c0_i32_0 = arith.constant 0 : i32
    return %c0_i32, %arg1 : i32, i32
  }
  func.func @transform_3(%arg0: i32, %arg1: i32) -> (i32, i32) {
    %c0_i32 = arith.constant 0 : i32
    %c0_i32_0 = arith.constant 0 : i32
    return %c0_i32, %arg1 : i32, i32
  }
  func.func @transform_4(%arg0: i32, %arg1: i32) -> (i32, i32) {
    %c0_i32 = arith.constant 0 : i32
    %c0_i32_0 = arith.constant 0 : i32
    return %c0_i32, %arg1 : i32, i32
  }
  func.func @transform_5(%arg0: i32, %arg1: i32) -> (i32, i32) {
    %c0_i32 = arith.constant 0 : i32
    %c0_i32_0 = arith.constant 0 : i32
    return %arg1, %c0_i32 : i32, i32
  }
  func.func @transform_6(%arg0: i32, %arg1: i32) -> (i32, i32) {
    %c0_i32 = arith.constant 0 : i32
    %c0_i32_0 = arith.constant 0 : i32
    %c0_i32_1 = arith.constant 0 : i32
    return %c0_i32, %c0_i32_0 : i32, i32
  }
  func.func @transform_7(%arg0: i32, %arg1: i32) -> (i32, i32) {
    %c0_i32 = arith.constant 0 : i32
    %c0_i32_0 = arith.constant 0 : i32
    return %arg0, %c0_i32 : i32, i32
  }
}

</mosaic_0001>

<llo_original>
// kernel: tpu_custom_call.1
$region0: #{tpu_custom_call.1}
  #allocation0 [shape = 'u32[]', space=smem, size = 0x4, offset = 0x4, fixed_abs, tag = 'smem constant byte address 0x4 - core index']
  #allocation1 [shape = 'u32[144,128]{1,0:T(1,128)}', space=vmem, size = 0x12000, scoped, tag = 'internal scratch']
  #allocation2 [shape = 'f32[16,32]{1,0:T(8,128)}', space=vmem, size = 0x2000, scoped, tag = 'scratch operand']
  %s0 = inlined_call_operand.vmem [shape: f32[16,32], index: 0, kind: input, shape index: {}]
  %s1 = inlined_call_operand.vmem [shape: f32[32,128], index: 1, kind: input, shape index: {}]
  %s2 = inlined_call_operand.vmem [shape: f32[1,128], index: 2, kind: input, shape index: {}]
  %s3 = inlined_call_operand.vmem [shape: f32[32,128], index: 3, kind: input, shape index: {}]
  %s4 = inlined_call_operand.vmem [shape: f32[1,128], index: 4, kind: input, shape index: {}]
  %s5 = inlined_call_operand.vmem [shape: f32[128,32], index: 5, kind: input, shape index: {}]
  %s6 = inlined_call_operand.vmem [shape: f32[1,32], index: 6, kind: input, shape index: {}]
  %s7 = inlined_call_operand.hbm [shape: f32[16,32], index: 7, kind: output, shape index: {}]
  %s8 = sld [smem:[#allocation0]]
  $region46: #{tpu_custom_call.1} parent=0
    _
  %s10 = ssub.s32 1, %s8
  %s11 = scalar_select 0, %s10, %s8
  $region1: #{tpu_custom_call.1} parent=0
    #allocation3 [shape = 'u8[8192]{0}', space=vmem, size = 0x2000, scoped, tag = 'output window, operand 0, single buffered']
    #allocation4 [shape = 's32[1]{0}', space=sflag, size = 0x4, scoped, tag = 'scoped memory for tpu_custom_call.1']
    %12 = vsyncpa [#allocation4], 0
    // Predicated region
    $region2: #{tpu_custom_call.1} parent=1 // pred_check
      _
    $region3: #{tpu_custom_call.1} parent=1 // pred_check_branch
      %14 = sbr.rel (0) target = $region5
    $region4: #{tpu_custom_call.1} parent=1 // pred_region
      _
    $region5: #{tpu_custom_call.1} parent=1 // pred_fallthru
      _
    // Predicated region
    $region6: #{tpu_custom_call.1} parent=1 // pred_check
      _
    $region7: #{tpu_custom_call.1} parent=1 // pred_check_branch
      %16 = sbr.rel (0) target = $region9
    $region8: #{tpu_custom_call.1} parent=1 // pred_region
      _
    $region9: #{tpu_custom_call.1} parent=1 // pred_fallthru
      _
    // Predicated region
    $region10: #{tpu_custom_call.1} parent=1 // pred_check
      _
    $region11: #{tpu_custom_call.1} parent=1 // pred_check_branch
      %18 = sbr.rel (0) target = $region13
    $region12: #{tpu_custom_call.1} parent=1 // pred_region
      _
    $region13: #{tpu_custom_call.1} parent=1 // pred_fallthru
      _
    // Predicated region
    $region14: #{tpu_custom_call.1} parent=1 // pred_check
      _
    $region15: #{tpu_custom_call.1} parent=1 // pred_check_branch
      %20 = sbr.rel (0) target = $region17
    $region16: #{tpu_custom_call.1} parent=1 // pred_region
      _
    $region17: #{tpu_custom_call.1} parent=1 // pred_fallthru
      _
    // Predicated region
    $region18: #{tpu_custom_call.1} parent=1 // pred_check
      _
    $region19: #{tpu_custom_call.1} parent=1 // pred_check_branch
      %22 = sbr.rel (0) target = $region21
    $region20: #{tpu_custom_call.1} parent=1 // pred_region
      _
    $region21: #{tpu_custom_call.1} parent=1 // pred_fallthru
      _
    // Predicated region
    $region22: #{tpu_custom_call.1} parent=1 // pred_check
      _
    $region23: #{tpu_custom_call.1} parent=1 // pred_check_branch
      %24 = sbr.rel (0) target = $region25
    $region24: #{tpu_custom_call.1} parent=1 // pred_region
      _
    $region25: #{tpu_custom_call.1} parent=1 // pred_fallthru
      _
    // Predicated region
    $region26: #{tpu_custom_call.1} parent=1 // pred_check
      _
    $region27: #{tpu_custom_call.1} parent=1 // pred_check_branch
      %26 = sbr.rel (0) target = $region29
    $region28: #{tpu_custom_call.1} parent=1 // pred_region
      _
    $region29: #{tpu_custom_call.1} parent=1 // pred_fallthru
      _
    %v27 = vld [vmem:[%s0] sm:$0xff]
    %v28 = vld [vmem:[%s0 + $0x8] sm:$0xff]
    %v29 = vld [vmem:[%s1] sm:$0xff]
    %v30 = vld [vmem:[%s1 + $0x8] sm:$0xff]
    %v31 = vld [vmem:[%s1 + $0x10] sm:$0xff]
    %v32 = vld [vmem:[%s1 + $0x18] sm:$0xff]
    %v33 = vld [vmem:[%s2] sm:$0x1]
    %v35 = vlaneseq
    %v36 = vshrl.u32 %v35, 7
    %v37 = vsub.s32 0, %v36
    %v38 = vrot.slane %v33, %v37
    %vm40 = vcmask 261120
    %v42 = vsel %vm40, %v27, 0
    %v45 = vsel %vm40, %v28, 0
    %47 = vmatprep.subr.mxu0 0.0
    %48 = vmatpush1.msra.mxu0 %v29
    %49 = vmatprep.subr.mxu0 0.0
    %50 = vmatpush1.msra.mxu0 %v30
    %51 = vmatprep.subr.mxu0 0.0
    %52 = vmatpush1.msra.mxu0 %v31
    %53 = vmatprep.subr.mxu0 0.0
    %54 = vmatpush1.msra.mxu0 %v32
    %55 = vmatprep.subr.mxu0 0.0
    %56 = vmatpush1.msra.mxu0 0.0
    %57 = vmatprep.subr.mxu0 0.0
    %58 = vmatpush1.msra.mxu0 0.0
    %59 = vmatprep.subr.mxu0 0.0
    %60 = vmatpush1.msra.mxu0 0.0
    %61 = vmatprep.subr.mxu0 0.0
    %62 = vmatpush1.msra.mxu0 0.0
    %63 = vmatprep.subr.mxu0 0.0
    %64 = vmatpush1.msra.mxu0 0.0
    %65 = vmatprep.subr.mxu0 0.0
    %66 = vmatpush1.msra.mxu0 0.0
    %67 = vmatprep.subr.mxu0 0.0
    %68 = vmatpush1.msra.mxu0 0.0
    %69 = vmatprep.subr.mxu0 0.0
    %70 = vmatpush1.msra.mxu0 0.0
    %71 = vmatprep.subr.mxu0 0.0
    %72 = vmatpush1.msra.mxu0 0.0
    %73 = vmatprep.subr.mxu0 0.0
    %74 = vmatpush1.msra.mxu0 0.0
    %75 = vmatprep.subr.mxu0 0.0
    %76 = vmatpush1.msra.mxu0 0.0
    %77 = vmatprep.subr.mxu0 0.0
    %78 = vmatpush1.msra.mxu0 0.0
    %79 = vmatprep.subr.mxu0 0.0
    %80 = vmatpush1.msra.mxu0 0.0
    %81 = vmatprep.subr.mxu0 0.0
    %82 = vmatpush1.msra.mxu0 0.0
    %83 = vmatprep.subr.mxu0 0.0
    %84 = vmatpush1.msra.mxu0 0.0
    %85 = vmatprep.subr.mxu0 0.0
    %86 = vmatpush1.msra.mxu0 0.0
    %87 = vmatprep.subr.mxu0 0.0
    %88 = vmatpush1.msra.mxu0 0.0
    %89 = vmatprep.subr.mxu0 0.0
    %90 = vmatpush1.msra.mxu0 0.0
    %91 = vmatprep.subr.mxu0 0.0
    %92 = vmatpush1.msra.mxu0 0.0
    %93 = vmatprep.subr.mxu0 0.0
    %94 = vmatpush1.msra.mxu0 0.0
    %95 = vmatprep.subr.mxu0 0.0
    %96 = vmatpush1.msra.mxu0 0.0
    %97 = vmatprep.subr.mxu0 0.0
    %98 = vmatpush1.msra.mxu0 0.0
    %99 = vmatprep.subr.mxu0 0.0
    %100 = vmatpush1.msra.mxu0 0.0
    %101 = vmatprep.subr.mxu0 0.0
    %102 = vmatpush1.msra.mxu0 0.0
    %103 = vmatprep.subr.mxu0 0.0
    %104 = vmatpush1.msra.mxu0 0.0
    %105 = vmatprep.subr.mxu0 0.0
    %106 = vmatpush1.msra.mxu0 0.0
    %107 = vmatprep.subr.mxu0 0.0
    %108 = vmatpush1.msra.mxu0 0.0
    %109 = vmatprep.subr.mxu0 0.0
    %110 = vmatpush1.msra.mxu0 0.0
    %111 = vmatprep.mubr.f32.mxu0 0.0
    %112 = vmatmul.mubr.f32.gmra.mrb[0].mxu0 %v42
    %v113 = vpop.f32.mrb[0].mxu0
    %v114 = vadd.f32 %v38, %v113
    %v115 = vpop.f32.mrb[0].mxu0
    %116 = vmatprep.mubr.f32.mxu0 0.0
    %117 = vmatmul.mubr.f32.gmra.mrb[0].mxu0 %v45
    %v118 = vpop.f32.mrb[0].mxu0
    %v119 = vadd.f32 %v38, %v118
    %v120 = vpop.f32.mrb[0].mxu0
    %121 = vdwg.mxu0
    %v122 = vld [vmem:[%s3] sm:$0xff]
    %v123 = vld [vmem:[%s3 + $0x8] sm:$0xff]
    %v124 = vld [vmem:[%s3 + $0x10] sm:$0xff]
    %v125 = vld [vmem:[%s3 + $0x18] sm:$0xff]
    %v126 = vld [vmem:[%s4] sm:$0x1]
    %v128 = vlaneseq
    %v129 = vshrl.u32 %v128, 7
    %v130 = vsub.s32 0, %v129
    %v131 = vrot.slane %v126, %v130
    %133 = vmatprep.subr.mxu0 0.0
    %134 = vmatpush1.msra.mxu0 %v122
    %135 = vmatprep.subr.mxu0 0.0
    %136 = vmatpush1.msra.mxu0 %v123
    %137 = vmatprep.subr.mxu0 0.0
    %138 = vmatpush1.msra.mxu0 %v124
    %139 = vmatprep.subr.mxu0 0.0
    %140 = vmatpush1.msra.mxu0 %v125
    %141 = vmatprep.subr.mxu0 0.0
    %142 = vmatpush1.msra.mxu0 0.0
    %143 = vmatprep.subr.mxu0 0.0
    %144 = vmatpush1.msra.mxu0 0.0
    %145 = vmatprep.subr.mxu0 0.0
    %146 = vmatpush1.msra.mxu0 0.0
    %147 = vmatprep.subr.mxu0 0.0
    %148 = vmatpush1.msra.mxu0 0.0
    %149 = vmatprep.subr.mxu0 0.0
    %150 = vmatpush1.msra.mxu0 0.0
    %151 = vmatprep.subr.mxu0 0.0
    %152 = vmatpush1.msra.mxu0 0.0
    %153 = vmatprep.subr.mxu0 0.0
    %154 = vmatpush1.msra.mxu0 0.0
    %155 = vmatprep.subr.mxu0 0.0
    %156 = vmatpush1.msra.mxu0 0.0
    %157 = vmatprep.subr.mxu0 0.0
    %158 = vmatpush1.msra.mxu0 0.0
    %159 = vmatprep.subr.mxu0 0.0
    %160 = vmatpush1.msra.mxu0 0.0
    %161 = vmatprep.subr.mxu0 0.0
    %162 = vmatpush1.msra.mxu0 0.0
    %163 = vmatprep.subr.mxu0 0.0
    %164 = vmatpush1.msra.mxu0 0.0
    %165 = vmatprep.subr.mxu0 0.0
    %166 = vmatpush1.msra.mxu0 0.0
    %167 = vmatprep.subr.mxu0 0.0
    %168 = vmatpush1.msra.mxu0 0.0
    %169 = vmatprep.subr.mxu0 0.0
    %170 = vmatpush1.msra.mxu0 0.0
    %171 = vmatprep.subr.mxu0 0.0
    %172 = vmatpush1.msra.mxu0 0.0
    %173 = vmatprep.subr.mxu0 0.0
    %174 = vmatpush1.msra.mxu0 0.0
    %175 = vmatprep.subr.mxu0 0.0
    %176 = vmatpush1.msra.mxu0 0.0
    %177 = vmatprep.subr.mxu0 0.0
    %178 = vmatpush1.msra.mxu0 0.0
    %179 = vmatprep.subr.mxu0 0.0
    %180 = vmatpush1.msra.mxu0 0.0
    %181 = vmatprep.subr.mxu0 0.0
    %182 = vmatpush1.msra.mxu0 0.0
    %183 = vmatprep.subr.mxu0 0.0
    %184 = vmatpush1.msra.mxu0 0.0
    %185 = vmatprep.subr.mxu0 0.0
    %186 = vmatpush1.msra.mxu0 0.0
    %187 = vmatprep.subr.mxu0 0.0
    %188 = vmatpush1.msra.mxu0 0.0
    %189 = vmatprep.subr.mxu0 0.0
    %190 = vmatpush1.msra.mxu0 0.0
    %191 = vmatprep.subr.mxu0 0.0
    %192 = vmatpush1.msra.mxu0 0.0
    %193 = vmatprep.subr.mxu0 0.0
    %194 = vmatpush1.msra.mxu0 0.0
    %195 = vmatprep.subr.mxu0 0.0
    %196 = vmatpush1.msra.mxu0 0.0
    %197 = vmatprep.mubr.f32.mxu0 0.0
    %198 = vmatmul.mubr.f32.gmra.mrb[0].mxu0 %v42
    %v199 = vpop.f32.mrb[0].mxu0
    %v200 = vadd.f32 %v131, %v199
    %v201 = vpop.f32.mrb[0].mxu0
    %202 = vmatprep.mubr.f32.mxu0 0.0
    %203 = vmatmul.mubr.f32.gmra.mrb[0].mxu0 %v45
    %v204 = vpop.f32.mrb[0].mxu0
    %v205 = vadd.f32 %v131, %v204
    %v206 = vpop.f32.mrb[0].mxu0
    %207 = vdwg.mxu0
    %v208 = vmul.f32 %v200, 0.5
    %v209 = vmul.f32 %v205, 0.5
    %v210 = vmul.f32 %v200, 0.70710677
    %v211 = vmul.f32 %v205, 0.70710677
    %v212 = verf.f32.pop %v210
    %v213 = verf.f32.pop %v211
    %v214 = vadd.f32 %v212, 1.0
    %v215 = vadd.f32 %v213, 1.0
    %v216 = vmul.f32 %v208, %v214
    %v217 = vmul.f32 %v209, %v215
    %v218 = vmul.f32 %v114, %v216
    %v219 = vmul.f32 %v119, %v217
    %v220 = vld [vmem:[%s5] sm:$0xff]
    %v221 = vld [vmem:[%s5 + $0x8] sm:$0xff]
    %v222 = vld [vmem:[%s5 + $0x10] sm:$0xff]
    %v223 = vld [vmem:[%s5 + $0x18] sm:$0xff]
    %v224 = vld [vmem:[%s5 + $0x20] sm:$0xff]
    %v225 = vld [vmem:[%s5 + $0x28] sm:$0xff]
    %v226 = vld [vmem:[%s5 + $0x30] sm:$0xff]
    %v227 = vld [vmem:[%s5 + $0x38] sm:$0xff]
    %v228 = vld [vmem:[%s5 + $0x40] sm:$0xff]
    %v229 = vld [vmem:[%s5 + $0x48] sm:$0xff]
    %v230 = vld [vmem:[%s5 + $0x50] sm:$0xff]
    %v231 = vld [vmem:[%s5 + $0x58] sm:$0xff]
    %v232 = vld [vmem:[%s5 + $0x60] sm:$0xff]
    %v233 = vld [vmem:[%s5 + $0x68] sm:$0xff]
    %v234 = vld [vmem:[%s5 + $0x70] sm:$0xff]
    %v235 = vld [vmem:[%s5 + $0x78] sm:$0xff]
    %236 = vmatprep.subr.mxu0 0.0
    %237 = vmatpush1.msra.mxu0 %v220
    %238 = vmatprep.subr.mxu0 0.0
    %239 = vmatpush1.msra.mxu0 %v221
    %240 = vmatprep.subr.mxu0 0.0
    %241 = vmatpush1.msra.mxu0 %v222
    %242 = vmatprep.subr.mxu0 0.0
    %243 = vmatpush1.msra.mxu0 %v223
    %244 = vmatprep.subr.mxu0 0.0
    %245 = vmatpush1.msra.mxu0 %v224
    %246 = vmatprep.subr.mxu0 0.0
    %247 = vmatpush1.msra.mxu0 %v225
    %248 = vmatprep.subr.mxu0 0.0
    %249 = vmatpush1.msra.mxu0 %v226
    %250 = vmatprep.subr.mxu0 0.0
    %251 = vmatpush1.msra.mxu0 %v227
    %252 = vmatprep.subr.mxu0 0.0
    %253 = vmatpush1.msra.mxu0 %v228
    %254 = vmatprep.subr.mxu0 0.0
    %255 = vmatpush1.msra.mxu0 %v229
    %256 = vmatprep.subr.mxu0 0.0
    %257 = vmatpush1.msra.mxu0 %v230
    %258 = vmatprep.subr.mxu0 0.0
    %259 = vmatpush1.msra.mxu0 %v231
    %260 = vmatprep.subr.mxu0 0.0
    %261 = vmatpush1.msra.mxu0 %v232
    %262 = vmatprep.subr.mxu0 0.0
    %263 = vmatpush1.msra.mxu0 %v233
    %264 = vmatprep.subr.mxu0 0.0
    %265 = vmatpush1.msra.mxu0 %v234
    %266 = vmatprep.subr.mxu0 0.0
    %267 = vmatpush1.msra.mxu0 %v235
    %268 = vmatprep.subr.mxu0 0.0
    %269 = vmatpush1.msra.mxu0 0.0
    %270 = vmatprep.subr.mxu0 0.0
    %271 = vmatpush1.msra.mxu0 0.0
    %272 = vmatprep.subr.mxu0 0.0
    %273 = vmatpush1.msra.mxu0 0.0
    %274 = vmatprep.subr.mxu0 0.0
    %275 = vmatpush1.msra.mxu0 0.0
    %276 = vmatprep.subr.mxu0 0.0
    %277 = vmatpush1.msra.mxu0 0.0
    %278 = vmatprep.subr.mxu0 0.0
    %279 = vmatpush1.msra.mxu0 0.0
    %280 = vmatprep.subr.mxu0 0.0
    %281 = vmatpush1.msra.mxu0 0.0
    %282 = vmatprep.subr.mxu0 0.0
    %283 = vmatpush1.msra.mxu0 0.0
    %284 = vmatprep.subr.mxu0 0.0
    %285 = vmatpush1.msra.mxu0 0.0
    %286 = vmatprep.subr.mxu0 0.0
    %287 = vmatpush1.msra.mxu0 0.0
    %288 = vmatprep.subr.mxu0 0.0
    %289 = vmatpush1.msra.mxu0 0.0
    %290 = vmatprep.subr.mxu0 0.0
    %291 = vmatpush1.msra.mxu0 0.0
    %292 = vmatprep.subr.mxu0 0.0
    %293 = vmatpush1.msra.mxu0 0.0
    %294 = vmatprep.subr.mxu0 0.0
    %295 = vmatpush1.msra.mxu0 0.0
    %296 = vmatprep.subr.mxu0 0.0
    %297 = vmatpush1.msra.mxu0 0.0
    %298 = vmatprep.subr.mxu0 0.0
    %299 = vmatpush1.msra.mxu0 0.0
    %300 = vmatprep.mubr.f32.mxu0 0.0
    %301 = vmatmul.mubr.f32.gmra.mrb[0].mxu0 %v218
    %v302 = vpop.f32.mrb[0].mxu0
    %v303 = vadd.f32 0.0, %v302
    %v304 = vpop.f32.mrb[0].mxu0
    %305 = vmatprep.mubr.f32.mxu0 0.0
    %306 = vmatmul.mubr.f32.gmra.mrb[0].mxu0 %v219
    %v307 = vpop.f32.mrb[0].mxu0
    %v308 = vadd.f32 0.0, %v307
    %v309 = vpop.f32.mrb[0].mxu0
    %310 = vdwg.mxu0
    %p311 = scmp.eq.s32.totalorder 0, 0
    // Predicated region
    $region30: #{tpu_custom_call.1} parent=1 // pred_check
      %p312 = pneg %p311
    $region31: #{tpu_custom_call.1} parent=1 // pred_check_branch
      %314 = sbr.rel (%p312) target = $region33
    $region32: #{tpu_custom_call.1} parent=1 // pred_region
      %v315 = vld [vmem:[%s6] sm:$0x1]
      %v317 = vlaneseq
      %v318 = vshrl.u32 %v317, 7
      %v319 = vsub.s32 0, %v318
      %v320 = vrot.slane %v315, %v319
      %322 = vst.msk [vmem:[#allocation2] sm:$0xff] %vm40, %v320
      %323 = vst.msk [vmem:[#allocation2 + $0x8] sm:$0xff] %vm40, %v320
    $region33: #{tpu_custom_call.1} parent=1 // pred_fallthru
      _
    %v324 = vld [vmem:[#allocation2] sm:$0xff]
    %v325 = vld [vmem:[#allocation2 + $0x8] sm:$0xff]
    %v326 = vadd.f32 %v324, %v303
    %v327 = vadd.f32 %v325, %v308
    %328 = vst.msk [vmem:[#allocation2] sm:$0xff] %vm40, %v326
    %329 = vst.msk [vmem:[#allocation2 + $0x8] sm:$0xff] %vm40, %v327
    // Predicated region
    $region34: #{tpu_custom_call.1} parent=1 // pred_check
      %p330 = pneg %p311
    $region35: #{tpu_custom_call.1} parent=1 // pred_check_branch
      %332 = sbr.rel (%p330) target = $region37
    $region36: #{tpu_custom_call.1} parent=1 // pred_region
      %v333 = vld [vmem:[#allocation2] sm:$0xff]
      %v334 = vld [vmem:[#allocation2 + $0x8] sm:$0xff]
      %335 = vst.msk [vmem:[#allocation3] sm:$0xff] %vm40, %v333
      %336 = vst.msk [vmem:[#allocation3 + $0x8] sm:$0xff] %vm40, %v334
    $region37: #{tpu_custom_call.1} parent=1 // pred_fallthru
      _
    // Predicated region
    $region38: #{tpu_custom_call.1} parent=1 // pred_check
      _
    $region39: #{tpu_custom_call.1} parent=1 // pred_check_branch
      %338 = sbr.rel (0) target = $region41
    $region40: #{tpu_custom_call.1} parent=1 // pred_region
      %s340 = ssub.s32 256, 256
      %341 = vsyncadd [#allocation4], %s340
      %s342 = sshll.u32 [#allocation3], 4
      %s343 = int_to_ptr.vmem [resolvable:$true] %s342
      %348 = dma.vmem_to_hbm [thread:$0]  %s343, 256, %s7, [#allocation4], 128, 128, 8
    $region41: #{tpu_custom_call.1} parent=1 // pred_fallthru
      _
    // Predicated region
    $region42: #{tpu_custom_call.1} parent=1 // pred_check
      _
    $region43: #{tpu_custom_call.1} parent=1 // pred_check_branch
      %350 = sbr.rel (0) target = $region45
    $region44: #{tpu_custom_call.1} parent=1 // pred_region
      %351 = dma.done [#allocation4], 256
    $region45: #{tpu_custom_call.1} parent=1 // pred_fallthru
      _
    %352 = vsyncpa [#allocation4], 1

</llo_original>
